<compile_context>
chip_gen: v5e
topology: v5e:2x2
jax: 0.10.0
libtpu: 0.0.40
codegen_flags: <defaults>
</compile_context>

<pallas_src>
import math

import numpy as np

import jax
import jax.numpy as jnp
from jax.experimental import pallas as pl
from jax.experimental.pallas import tpu as pltpu

F32 = jnp.float32
BN_EPS = 1e-5


# ----------------------------------------------------------------------------
# Slab packing helper (runs once, at init time, on host)
# ----------------------------------------------------------------------------
class _SlabBuilder:
    def __init__(self, lanes, row_align=8):
        self.lanes = lanes
        self.row_align = row_align
        self.items = []
        self.offsets = {}
        self.cur = 0

    def add(self, name, mat):
        mat = np.asarray(mat, np.float32)
        if mat.ndim == 1:
            mat = mat[None, :]
        r, c = mat.shape
        assert c <= self.lanes, (name, mat.shape)
        start = self.cur
        self.items.append((start, mat))
        self.offsets[name] = (start, r, c)
        self.cur = start + ((r + self.row_align - 1) // self.row_align) * self.row_align

    def build(self):
        total = ((self.cur + 7) // 8) * 8
        slab = np.zeros((total, self.lanes), np.float32)
        for start, mat in self.items:
            r, c = mat.shape
            slab[start:start + r, :c] = mat
        return slab, self.offsets


# ----------------------------------------------------------------------------
# Fused kernel
# ----------------------------------------------------------------------------
def make_sgnn_kernel(N, heads, d, woff, voff):
    H = heads

    def elu(z):
        # ELU(alpha=1).  exp(x)-1 kept (guaranteed lowering); expm1 would be
        # marginally more accurate near 0.
        return jnp.where(z > 0, z, jnp.exp(z) - 1.0)

    def bn_elu(z, s, t):
        # eval-mode BatchNorm1d folded to scale/shift (preceding bias already
        # absorbed into the shift at init time), then ELU.
        return elu(z * s + t)

    def kernel(adjt_ref, adjn_ref, x_ref, w_ref, v_ref, o_ref):
        f32 = F32
        neg = jnp.float32(-1e30)

        def wm(name):                           # static slice of weight slab
            r0, r, c = woff[name]
            return w_ref[r0:r0 + r, 0:c]

        def vrow(name):                         # static (1, c) slice of vector slab
            r0, _, c = voff[name]
            return v_ref[r0:r0 + 1, 0:c]

        adjm = adjt_ref[...]                    # (N, H*N) 0/1 mask tiled per head
        adj = adjm[:, 0:N]                      # (N, N)
        an = adjn_ref[...]                      # (N, N) normalised adjacency
        x = x_ref[...]                          # (N, in_c)
        ones_n = jnp.ones((N, N), f32)
        tiled_i = wm('tiled_i')                 # (N, H*N) horizontally tiled identity
        eye_n = tiled_i[:, 0:N]                 # (N, N) identity

        # ------------- trans branch: GAT (heads, concat=True), lane-dense ----
        h1 = jnp.dot(x, wm('tc1_w'), preferred_element_type=f32)          # (N, hc)
        dstp = jnp.dot(h1, wm('ade'), preferred_element_type=f32)         # (N, H*N)
        srce = jnp.dot(h1, wm('ase'), preferred_element_type=f32)         # (N, H*N)
        srcp = jnp.dot(ones_n, tiled_i * srce, preferred_element_type=f32)
        e = dstp + srcp                                                    # e[i,hN+j]=dst_h[i]+src_h[j]
        e = jnp.where(e > 0, e, 0.2 * e)                                   # LeakyReLU(0.2)
        e = jnp.where(adjm > 0, e, neg)
        # Global-row-max shift (exactly equivalent to per-head max here; score
        # spread is O(1) so no block underflow).  Per-head normalisation via
        # one block-sum matmul; every block contains its self-loop -> den > 0.
        e = e - jnp.max(e, axis=-1, keepdims=True)
        pe = jnp.exp(e)
        denw = jnp.dot(pe, wm('blksum'), preferred_element_type=f32)      # per-head sums, bcast
        attn = pe * pl.reciprocal(denw, approx=True)                      # (N, H*N)
        bd = jnp.dot(wm('tiled_it'), h1, preferred_element_type=f32) * wm('blkmask')
        t1 = jnp.dot(attn, bd, preferred_element_type=f32)                # (N, hc) == concat(heads)
        t1 = bn_elu(t1, vrow('tbn1_s'), vrow('tbn1_t'))
        h2 = jnp.dot(t1, wm('tc2_w'), preferred_element_type=f32)         # (N, d)

        # ------------- trans branch: GAT (1 head, concat=False) --------------
        sd2 = jnp.dot(h2, wm('a2'), preferred_element_type=f32)           # (N, 2): [src, dst]
        src_row = jnp.dot(ones_n, eye_n * sd2[:, 0:1],
                          preferred_element_type=f32)                     # rows = src^T
        e2 = sd2[:, 1:2] + src_row
        e2 = jnp.where(e2 > 0, e2, 0.2 * e2)
        e2 = jnp.where(adj > 0, e2, neg)
        e2 = e2 - jnp.max(e2, axis=-1, keepdims=True)
        p2 = jnp.exp(e2)
        attn2 = p2 * pl.reciprocal(jnp.sum(p2, axis=-1, keepdims=True), approx=True)
        t = jnp.dot(attn2, h2, preferred_element_type=f32)
        t = bn_elu(t, vrow('tbn2_s'), vrow('tbn2_t'))                     # (N, d)

        # ------------- ident branch: GCN x2 ----------------------------------
        i1 = jnp.dot(an, jnp.dot(x, wm('ic1_w'), preferred_element_type=f32),
                     preferred_element_type=f32)
        i1 = bn_elu(i1, vrow('ibn1_s'), vrow('ibn1_t'))
        i2 = jnp.dot(an, jnp.dot(i1, wm('ic2_w'), preferred_element_type=f32),
                     preferred_element_type=f32)
        i2 = bn_elu(i2, vrow('ibn2_s'), vrow('ibn2_t'))                   # (N, d)

        # ------------- fusion (concat folded into two matmuls) ---------------
        fx = (jnp.dot(t, wm('fus_wt'), preferred_element_type=f32)
              + jnp.dot(i2, wm('fus_wi'), preferred_element_type=f32))
        fx = bn_elu(fx, vrow('fbn_s'), vrow('fbn_t'))                     # (N, d)

        # ------------- per-node multi-head attention, lane-dense -------------
        # qe/ke/ve are the per-head-pair expansions computed directly from fx
        # via pre-folded (d, H*H*dh) weights (1/sqrt(dh) folded into qwe/qbe).
        qe = jnp.dot(fx, wm('qwe'), preferred_element_type=f32) + vrow('qbe')
        ke = jnp.dot(fx, wm('kwe'), preferred_element_type=f32) + vrow('kbe')
        ve = jnp.dot(fx, wm('vwe'), preferred_element_type=f32) + vrow('vbe')
        s = jnp.dot(qe * ke, wm('rsum'), preferred_element_type=f32)      # (N, H*H) scores
        s = s - jnp.max(s, axis=-1, keepdims=True)
        ps = jnp.exp(s)
        dmw = jnp.dot(ps, wm('mblksum'), preferred_element_type=f32)      # per-query-head sums
        am = ps * pl.reciprocal(dmw, approx=True)                         # (N, H*H)
        ae = jnp.dot(am, wm('aexp'), preferred_element_type=f32)          # (N, H*H*dh)
        a = (jnp.dot(ae * ve, wm('pow'), preferred_element_type=f32)      # OSUM@p_w pre-folded
             + vrow('p_b'))                                               # (N, d)

        # ------------- classifier (temperature folded) + log_softmax ---------
        c = jnp.dot(a, wm('cl1_w'), preferred_element_type=f32)
        c = bn_elu(c, vrow('cbn_s'), vrow('cbn_t'))
        logits = jnp.dot(c, wm('cl2_w'), preferred_element_type=f32) + vrow('cl2_b')
        z = logits - jnp.max(logits, axis=-1, keepdims=True)
        o_ref[...] = z - jnp.log(jnp.sum(jnp.exp(z), axis=-1, keepdims=True))

    return kernel


# ----------------------------------------------------------------------------
# Jitted wrapper: a single pallas_call, no per-call preprocessing
# ----------------------------------------------------------------------------
def make_forward(N, heads, d, out_c, out_pad, woff, voff):
    kernel = make_sgnn_kernel(N, heads, d, woff, voff)
    vmem = pltpu.MemorySpace.VMEM

    @jax.jit
    def fwd(w_slab, v_slab, x, adj_tiled, adj_norm):
        out = pl.pallas_call(
            kernel,
            out_shape=jax.ShapeDtypeStruct((N, out_pad), F32),
            in_specs=[pl.BlockSpec(memory_space=vmem)] * 5,
            out_specs=pl.BlockSpec(memory_space=vmem),
        )(adj_tiled, adj_norm, x, w_slab, v_slab)
        return out[:, :out_c]

    return fwd


# ----------------------------------------------------------------------------
# One-time parameter folding / packing (host side, init time only)
# ----------------------------------------------------------------------------
def prepare_params(p, N, in_c, hc, d, heads, out_c):
    H = heads
    dh = d // H
    hh = H * H
    out_pad = ((out_c + 7) // 8) * 8
    lanes = max(hc, H * N, hh * dh, in_c, out_pad)
    scale = 1.0 / math.sqrt(dh)

    # constant expansion / gather matrices (0/1, exact)
    expand = np.kron(np.eye(H), np.ones((1, N)))            # (H, H*N)
    tiled_i = np.tile(np.eye(N), (1, H))                     # (N, H*N)
    blkmask = np.kron(np.eye(H), np.ones((N, d)))            # (H*N, hc)
    blksum = np.kron(np.eye(H), np.ones((N, N)))             # (H*N, H*N)
    SQ = np.zeros((d, hh * dh)); SK = np.zeros((d, hh * dh)); OSUM = np.zeros((hh * dh, d))
    for i in range(H):
        for j in range(H):
            for c in range(dh):
                col = (i * H + j) * dh + c
                SQ[i * dh + c, col] = 1.0
                SK[j * dh + c, col] = 1.0
                OSUM[col, i * dh + c] = 1.0
    RSUM = np.kron(np.eye(hh), np.ones((dh, 1)))             # (H*H*dh, H*H)
    MBLKSUM = np.kron(np.eye(H), np.ones((H, H)))            # (H*H, H*H)
    AEXP = np.kron(np.eye(hh), np.ones((1, dh)))             # (H*H, H*H*dh)

    g = lambda k: np.asarray(p[k], np.float32)

    def fold_bn(bn, bias):                                   # BN(z + bias) -> z*s + t
        s = np.asarray(bn['g'], np.float32) / np.sqrt(np.asarray(bn['v'], np.float32) + BN_EPS)
        t = (np.asarray(bias, np.float32) - np.asarray(bn['m'], np.float32)) * s \
            + np.asarray(bn['b'], np.float32)
        return s, t

    # ----- weight / constant slab -----
    wb = _SlabBuilder(lanes, row_align=8)
    wb.add('tc1_w', g('tc1_w'))
    wb.add('ade', g('tc1_adstM') @ expand)                   # (hc, H*N)
    wb.add('ase', g('tc1_asrcM') @ expand)                   # (hc, H*N)
    wb.add('tc2_w', g('tc2_w'))
    wb.add('a2', np.concatenate([g('tc2_asrcM'), g('tc2_adstM')], axis=1))   # (d, 2)
    wb.add('ic1_w', g('ic1_w'))
    wb.add('ic2_w', g('ic2_w'))
    wb.add('fus_wt', g('fus_w')[:d, :])                      # concat([t,i])@W == t@Wt + i@Wi
    wb.add('fus_wi', g('fus_w')[d:, :])
    wb.add('qwe', (g('q_w') @ SQ) * scale)                   # (d, H*H*dh), scale folded
    wb.add('kwe', g('k_w') @ SK)
    wb.add('vwe', g('v_w') @ SK)
    wb.add('pow', OSUM @ g('p_w'))                           # head-gather folded into proj
    wb.add('cl1_w', g('cl1_w'))
    cl2_w = np.zeros((d, out_pad), np.float32)
    cl2_w[:, :out_c] = g('cl2_w') * 2.0                      # temperature 0.5 folded
    wb.add('cl2_w', cl2_w)
    wb.add('tiled_i', tiled_i)
    wb.add('tiled_it', tiled_i.T)
    wb.add('blkmask', blkmask)
    wb.add('blksum', blksum)
    wb.add('rsum', RSUM)
    wb.add('mblksum', MBLKSUM)
    wb.add('aexp', AEXP)
    w_slab, woff = wb.build()

    # ----- bias / BN scale-shift slab (one row each) -----
    vb = _SlabBuilder(lanes, row_align=1)
    for nm, bn, bias in [('tbn1', p['tbn1'], g('tc1_b')),
                         ('tbn2', p['tbn2'], g('tc2_b')),
                         ('ibn1', p['ibn1'], g('ic1_b')),
                         ('ibn2', p['ibn2'], g('ic2_b')),
                         ('fbn',  p['fbn'],  g('fus_b')),
                         ('cbn',  p['cbn'],  g('cl1_b'))]:
        s, t = fold_bn(bn, bias)
        vb.add(nm + '_s', s)
        vb.add(nm + '_t', t)
    vb.add('qbe', (g('q_b') @ SQ) * scale)
    vb.add('kbe', g('k_b') @ SK)
    vb.add('vbe', g('v_b') @ SK)
    vb.add('p_b', g('p_b'))
    cl2_b = np.full((1, out_pad), -1e30, np.float32)         # pad cols: -1e30 (not rescaled)
    cl2_b[:, :out_c] = g('cl2_b') * 2.0
    vb.add('cl2_b', cl2_b)
    v_slab, voff = vb.build()

    packed = dict(W=jnp.asarray(w_slab), V=jnp.asarray(v_slab))
    return packed, woff, voff, out_pad


# ----------------------------------------------------------------------------
# Parameter construction (deterministic, kaiming fan_in scaling)
# ----------------------------------------------------------------------------
def kaiming(key, fan_in, shape):
    return (jnp.sqrt(2.0 / fan_in) * jax.random.normal(key, shape)).astype(F32)


def bn_params(dim):
    return dict(g=jnp.ones((1, dim), F32), b=jnp.zeros((1, dim), F32),
                m=jnp.zeros((1, dim), F32), v=jnp.ones((1, dim), F32))


def block_diag_att(att):  # att: (heads, d) -> (heads*d, heads)
    heads, d = att.shape
    m = jnp.zeros((heads * d, heads), F32)
    for h in range(heads):
        m = m.at[h * d:(h + 1) * d, h].set(att[h])
    return m


def init_params(key, in_channels, hidden_channels, out_channels, num_heads):
    hc = hidden_channels // num_heads * num_heads
    d = hc // num_heads
    ks = jax.random.split(key, 16)
    p = {}
    # trans branch (GAT x2)
    p['tc1_w'] = kaiming(ks[0], in_channels, (in_channels, hc))
    p['tc1_asrcM'] = block_diag_att(0.1 * jax.random.normal(ks[1], (num_heads, d)).astype(F32))
    p['tc1_adstM'] = block_diag_att(0.1 * jax.random.normal(ks[2], (num_heads, d)).astype(F32))
    p['tc1_b'] = jnp.zeros((1, hc), F32)
    p['tbn1'] = bn_params(hc)
    p['tc2_w'] = kaiming(ks[3], hc, (hc, d))
    p['tc2_asrcM'] = block_diag_att(0.1 * jax.random.normal(ks[4], (1, d)).astype(F32))
    p['tc2_adstM'] = block_diag_att(0.1 * jax.random.normal(ks[5], (1, d)).astype(F32))
    p['tc2_b'] = jnp.zeros((1, d), F32)
    p['tbn2'] = bn_params(d)
    # ident branch (GCN x2)
    p['ic1_w'] = kaiming(ks[6], in_channels, (in_channels, d))
    p['ic1_b'] = jnp.zeros((1, d), F32)
    p['ibn1'] = bn_params(d)
    p['ic2_w'] = kaiming(ks[7], d, (d, d))
    p['ic2_b'] = jnp.zeros((1, d), F32)
    p['ibn2'] = bn_params(d)
    # fusion
    p['fus_w'] = kaiming(ks[8], 2 * d, (2 * d, d))
    p['fus_b'] = jnp.zeros((1, d), F32)
    p['fbn'] = bn_params(d)
    # per-node multi-head attention over d channels
    p['q_w'] = kaiming(ks[9], d, (d, d)); p['q_b'] = jnp.zeros((1, d), F32)
    p['k_w'] = kaiming(ks[10], d, (d, d)); p['k_b'] = jnp.zeros((1, d), F32)
    p['v_w'] = kaiming(ks[11], d, (d, d)); p['v_b'] = jnp.zeros((1, d), F32)
    p['p_w'] = kaiming(ks[12], d, (d, d)); p['p_b'] = jnp.zeros((1, d), F32)
    # classifier
    p['cl1_w'] = kaiming(ks[13], d, (d, d)); p['cl1_b'] = jnp.zeros((1, d), F32)
    p['cbn'] = bn_params(d)
    p['cl2_w'] = kaiming(ks[14], d, (d, out_channels))
    p['cl2_b'] = jnp.zeros((1, out_channels), F32)
    return p, hc, d


# ----------------------------------------------------------------------------
# Graph preprocessing (glue, once per graph)
# ----------------------------------------------------------------------------
def build_adjacency(edge_index, num_nodes, heads):
    src, dst = edge_index[0], edge_index[1]
    A = jnp.zeros((num_nodes, num_nodes), F32).at[dst, src].set(1.0)
    A = jnp.minimum(A + jnp.eye(num_nodes, dtype=F32), 1.0)      # add self-loops
    deg = jnp.sum(A, axis=1)
    dinv = jax.lax.rsqrt(deg)
    adj_norm = dinv[:, None] * A * dinv[None, :]                 # D^-1/2 (A+I) D^-1/2
    adj_tiled = jnp.tile(A, (1, heads))                          # (N, heads*N) GAT mask
    return A, adj_norm, adj_tiled


# ----------------------------------------------------------------------------
if __name__ == "__main__":
    N = 8                 # nodes
    IN_C, HID_C, OUT_C, HEADS = 16, 32, 7, 4

    key = jax.random.PRNGKey(0)
    k_x, k_p = jax.random.split(key)

    # node features
    x = jax.random.normal(k_x, (N, IN_C)).astype(F32)

    # deterministic undirected graph: ring + two chords
    e = [(n, (n + 1) % N) for n in range(N)] + [(0, 4), (2, 6)]
    src = [a for a, b in e] + [b for a, b in e]
    dst = [b for a, b in e] + [a for a, b in e]
    edge_index = jnp.array([src, dst], dtype=jnp.int32)

    params, hc, d = init_params(k_p, IN_C, HID_C, OUT_C, HEADS)
    adj_mask, adj_norm, adj_tiled = build_adjacency(edge_index, N, HEADS)

    packed, woff, voff, out_pad = prepare_params(params, N, IN_C, hc, d, HEADS, OUT_C)
    forward = make_forward(N, HEADS, d, OUT_C, out_pad, woff, voff)

    out = forward(packed['W'], packed['V'], x, adj_tiled, adj_norm)
    out = jax.block_until_ready(out)

    assert out.shape == (N, OUT_C)
    assert bool(jnp.all(jnp.isfinite(out)))
    # log_softmax rows must exponentiate-sum to 1
    row_sums = jnp.sum(jnp.exp(out), axis=1)
    assert bool(jnp.all(jnp.abs(row_sums - 1.0) < 1e-3))
    print("KERNEL_OK")
</pallas_src>

<mosaic_0001>
module attributes {stable_mosaic.version = 11 : i64} {
  func.func @kernel(%arg0: memref<8x32xf32, #tpu.memory_space<vmem>>, %arg1: memref<8x8xf32, #tpu.memory_space<vmem>>, %arg2: memref<8x16xf32, #tpu.memory_space<vmem>>, %arg3: memref<400x32xf32, #tpu.memory_space<vmem>>, %arg4: memref<24x32xf32, #tpu.memory_space<vmem>>, %arg5: memref<8x8xf32, #tpu.memory_space<vmem>>) attributes {dimension_semantics = [], scalar_prefetch = 0 : i64, scratch_operands = 0 : i64, tpu.core_type = #tpu.core_type<tc>} {
    %c0 = arith.constant 0 : index
    %c0_0 = arith.constant 0 : index
    %0 = vector.load %arg0[%c0, %c0_0] : memref<8x32xf32, #tpu.memory_space<vmem>>, vector<8x32xf32>
    %1 = vector.extract_strided_slice %0 {offsets = [0, 0], sizes = [8, 8], strides = [1, 1]} : vector<8x32xf32> to vector<8x8xf32>
    %c0_1 = arith.constant 0 : index
    %c0_2 = arith.constant 0 : index
    %2 = vector.load %arg1[%c0_1, %c0_2] : memref<8x8xf32, #tpu.memory_space<vmem>>, vector<8x8xf32>
    %c0_3 = arith.constant 0 : index
    %c0_4 = arith.constant 0 : index
    %3 = vector.load %arg2[%c0_3, %c0_4] : memref<8x16xf32, #tpu.memory_space<vmem>>, vector<8x16xf32>
    %cst = arith.constant 1.000000e+00 : f32
    %4 = vector.broadcast %cst : f32 to vector<8x8xf32>
    %c232 = arith.constant 232 : index
    %c0_5 = arith.constant 0 : index
    %5 = vector.load %arg3[%c232, %c0_5] : memref<400x32xf32, #tpu.memory_space<vmem>>, vector<8x32xf32>
    %6 = vector.extract_strided_slice %5 {offsets = [0, 0], sizes = [8, 8], strides = [1, 1]} : vector<8x32xf32> to vector<8x8xf32>
    %c0_6 = arith.constant 0 : index
    %c0_7 = arith.constant 0 : index
    %7 = vector.load %arg3[%c0_6, %c0_7] : memref<400x32xf32, #tpu.memory_space<vmem>>, vector<16x32xf32>
    %cst_8 = arith.constant dense<0.000000e+00> : vector<8x32xf32>
    %8 = tpu.matmul %3, %7, %cst_8 {dimension_numbers = #tpu.dot_dimension_numbers<[1], [0], [0], [1], [0, 0, 1, 1], [], []>} : vector<8x16xf32>, vector<16x32xf32>, vector<8x32xf32> -> vector<8x32xf32>
    %c16 = arith.constant 16 : index
    %c0_9 = arith.constant 0 : index
    %9 = vector.load %arg3[%c16, %c0_9] : memref<400x32xf32, #tpu.memory_space<vmem>>, vector<32x32xf32>
    %cst_10 = arith.constant dense<0.000000e+00> : vector<8x32xf32>
    %10 = tpu.matmul %8, %9, %cst_10 {dimension_numbers = #tpu.dot_dimension_numbers<[1], [0], [0], [1], [0, 0, 1, 1], [], []>} : vector<8x32xf32>, vector<32x32xf32>, vector<8x32xf32> -> vector<8x32xf32>
    %c48 = arith.constant 48 : index
    %c0_11 = arith.constant 0 : index
    %11 = vector.load %arg3[%c48, %c0_11] : memref<400x32xf32, #tpu.memory_space<vmem>>, vector<32x32xf32>
    %cst_12 = arith.constant dense<0.000000e+00> : vector<8x32xf32>
    %12 = tpu.matmul %8, %11, %cst_12 {dimension_numbers = #tpu.dot_dimension_numbers<[1], [0], [0], [1], [0, 0, 1, 1], [], []>} : vector<8x32xf32>, vector<32x32xf32>, vector<8x32xf32> -> vector<8x32xf32>
    %13 = arith.mulf %5, %12 : vector<8x32xf32>
    %cst_13 = arith.constant dense<0.000000e+00> : vector<8x32xf32>
    %14 = tpu.matmul %4, %13, %cst_13 {dimension_numbers = #tpu.dot_dimension_numbers<[1], [0], [0], [1], [0, 0, 1, 1], [], []>} : vector<8x8xf32>, vector<8x32xf32>, vector<8x32xf32> -> vector<8x32xf32>
    %15 = arith.addf %10, %14 : vector<8x32xf32>
    %cst_14 = arith.constant 0.000000e+00 : f32
    %16 = vector.broadcast %cst_14 : f32 to vector<8x32xf32>
    %17 = arith.cmpf ogt, %15, %16 : vector<8x32xf32>
    %cst_15 = arith.constant 2.000000e-01 : f32
    %18 = vector.broadcast %cst_15 : f32 to vector<8x32xf32>
    %19 = arith.mulf %18, %15 : vector<8x32xf32>
    %20 = arith.select %17, %15, %19 : vector<8x32xi1>, vector<8x32xf32>
    %cst_16 = arith.constant 0.000000e+00 : f32
    %21 = vector.broadcast %cst_16 : f32 to vector<8x32xf32>
    %22 = arith.cmpf ogt, %0, %21 : vector<8x32xf32>
    %cst_17 = arith.constant -1.000000e+30 : f32
    %23 = vector.broadcast %cst_17 : f32 to vector<8x32xf32>
    %24 = arith.select %22, %20, %23 : vector<8x32xi1>, vector<8x32xf32>
    %cst_18 = arith.constant dense<0xFF800000> : vector<8xf32>
    %25 = vector.multi_reduction <maximumf>, %24, %cst_18 [1] : vector<8x32xf32> to vector<8xf32>
    %26 = vector.shape_cast %25 : vector<8xf32> to vector<8x1xf32>
    %27 = vector.broadcast %26 : vector<8x1xf32> to vector<8x32xf32>
    %28 = arith.subf %24, %27 : vector<8x32xf32>
    %29 = math.exp %28 : vector<8x32xf32>
    %c304 = arith.constant 304 : index
    %c0_19 = arith.constant 0 : index
    %30 = vector.load %arg3[%c304, %c0_19] : memref<400x32xf32, #tpu.memory_space<vmem>>, vector<32x32xf32>
    %cst_20 = arith.constant dense<0.000000e+00> : vector<8x32xf32>
    %31 = tpu.matmul %29, %30, %cst_20 {dimension_numbers = #tpu.dot_dimension_numbers<[1], [0], [0], [1], [0, 0, 1, 1], [], []>} : vector<8x32xf32>, vector<32x32xf32>, vector<8x32xf32> -> vector<8x32xf32>
    %32 = tpu.reciprocal %31 {approx = true} : vector<8x32xf32> -> vector<8x32xf32>
    %33 = arith.mulf %29, %32 : vector<8x32xf32>
    %c240 = arith.constant 240 : index
    %c0_21 = arith.constant 0 : index
    %34 = vector.load %arg3[%c240, %c0_21] : memref<400x32xf32, #tpu.memory_space<vmem>>, vector<32x8xf32>
    %cst_22 = arith.constant dense<0.000000e+00> : vector<32x32xf32>
    %35 = tpu.matmul %34, %8, %cst_22 {dimension_numbers = #tpu.dot_dimension_numbers<[1], [0], [0], [1], [0, 0, 1, 1], [], []>} : vector<32x8xf32>, vector<8x32xf32>, vector<32x32xf32> -> vector<32x32xf32>
    %c272 = arith.constant 272 : index
    %c0_23 = arith.constant 0 : index
    %36 = vector.load %arg3[%c272, %c0_23] : memref<400x32xf32, #tpu.memory_space<vmem>>, vector<32x32xf32>
    %37 = arith.mulf %35, %36 : vector<32x32xf32>
    %cst_24 = arith.constant dense<0.000000e+00> : vector<8x32xf32>
    %38 = tpu.matmul %33, %37, %cst_24 {dimension_numbers = #tpu.dot_dimension_numbers<[1], [0], [0], [1], [0, 0, 1, 1], [], []>} : vector<8x32xf32>, vector<32x32xf32>, vector<8x32xf32> -> vector<8x32xf32>
    %c0_25 = arith.constant 0 : index
    %c0_26 = arith.constant 0 : index
    %39 = vector.load %arg4[%c0_25, %c0_26] : memref<24x32xf32, #tpu.memory_space<vmem>>, vector<1x32xf32>
    %c1 = arith.constant 1 : index
    %c0_27 = arith.constant 0 : index
    %40 = vector.load %arg4[%c1, %c0_27] : memref<24x32xf32, #tpu.memory_space<vmem>>, vector<1x32xf32>
    %41 = vector.broadcast %39 : vector<1x32xf32> to vector<8x32xf32>
    %42 = arith.mulf %38, %41 : vector<8x32xf32>
    %43 = vector.broadcast %40 : vector<1x32xf32> to vector<8x32xf32>
    %44 = arith.addf %42, %43 : vector<8x32xf32>
    %cst_28 = arith.constant 0.000000e+00 : f32
    %45 = vector.broadcast %cst_28 : f32 to vector<8x32xf32>
    %46 = arith.cmpf ogt, %44, %45 : vector<8x32xf32>
    %47 = math.exp %44 : vector<8x32xf32>
    %cst_29 = arith.constant 1.000000e+00 : f32
    %48 = vector.broadcast %cst_29 : f32 to vector<8x32xf32>
    %49 = arith.subf %47, %48 : vector<8x32xf32>
    %50 = arith.select %46, %44, %49 : vector<8x32xi1>, vector<8x32xf32>
    %c80 = arith.constant 80 : index
    %c0_30 = arith.constant 0 : index
    %51 = vector.load %arg3[%c80, %c0_30] : memref<400x32xf32, #tpu.memory_space<vmem>>, vector<32x8xf32>
    %cst_31 = arith.constant dense<0.000000e+00> : vector<8x8xf32>
    %52 = tpu.matmul %50, %51, %cst_31 {dimension_numbers = #tpu.dot_dimension_numbers<[1], [0], [0], [1], [0, 0, 1, 1], [], []>} : vector<8x32xf32>, vector<32x8xf32>, vector<8x8xf32> -> vector<8x8xf32>
    %c112 = arith.constant 112 : index
    %c0_32 = arith.constant 0 : index
    %53 = vector.load %arg3[%c112, %c0_32] : memref<400x32xf32, #tpu.memory_space<vmem>>, vector<8x2xf32>
    %cst_33 = arith.constant dense<0.000000e+00> : vector<8x2xf32>
    %54 = tpu.matmul %52, %53, %cst_33 {dimension_numbers = #tpu.dot_dimension_numbers<[1], [0], [0], [1], [0, 0, 1, 1], [], []>} : vector<8x8xf32>, vector<8x2xf32>, vector<8x2xf32> -> vector<8x2xf32>
    %55 = vector.extract_strided_slice %54 {offsets = [0, 0], sizes = [8, 1], strides = [1, 1]} : vector<8x2xf32> to vector<8x1xf32>
    %56 = vector.broadcast %55 : vector<8x1xf32> to vector<8x8xf32>
    %57 = arith.mulf %6, %56 : vector<8x8xf32>
    %cst_34 = arith.constant dense<0.000000e+00> : vector<8x8xf32>
    %58 = tpu.matmul %4, %57, %cst_34 {dimension_numbers = #tpu.dot_dimension_numbers<[1], [0], [0], [1], [0, 0, 1, 1], [], []>} : vector<8x8xf32>, vector<8x8xf32>, vector<8x8xf32> -> vector<8x8xf32>
    %59 = vector.extract_strided_slice %54 {offsets = [0, 1], sizes = [8, 1], strides = [1, 1]} : vector<8x2xf32> to vector<8x1xf32>
    %60 = vector.broadcast %59 : vector<8x1xf32> to vector<8x8xf32>
    %61 = arith.addf %60, %58 : vector<8x8xf32>
    %cst_35 = arith.constant 0.000000e+00 : f32
    %62 = vector.broadcast %cst_35 : f32 to vector<8x8xf32>
    %63 = arith.cmpf ogt, %61, %62 : vector<8x8xf32>
    %cst_36 = arith.constant 2.000000e-01 : f32
    %64 = vector.broadcast %cst_36 : f32 to vector<8x8xf32>
    %65 = arith.mulf %64, %61 : vector<8x8xf32>
    %66 = arith.select %63, %61, %65 : vector<8x8xi1>, vector<8x8xf32>
    %cst_37 = arith.constant 0.000000e+00 : f32
    %67 = vector.broadcast %cst_37 : f32 to vector<8x8xf32>
    %68 = arith.cmpf ogt, %1, %67 : vector<8x8xf32>
    %cst_38 = arith.constant -1.000000e+30 : f32
    %69 = vector.broadcast %cst_38 : f32 to vector<8x8xf32>
    %70 = arith.select %68, %66, %69 : vector<8x8xi1>, vector<8x8xf32>
    %cst_39 = arith.constant dense<0xFF800000> : vector<8xf32>
    %71 = vector.multi_reduction <maximumf>, %70, %cst_39 [1] : vector<8x8xf32> to vector<8xf32>
    %72 = vector.shape_cast %71 : vector<8xf32> to vector<8x1xf32>
    %73 = vector.broadcast %72 : vector<8x1xf32> to vector<8x8xf32>
    %74 = arith.subf %70, %73 : vector<8x8xf32>
    %75 = math.exp %74 : vector<8x8xf32>
    %cst_40 = arith.constant dense<0.000000e+00> : vector<8xf32>
    %76 = vector.multi_reduction <add>, %75, %cst_40 [1] : vector<8x8xf32> to vector<8xf32>
    %77 = vector.shape_cast %76 : vector<8xf32> to vector<8x1xf32>
    %78 = tpu.reciprocal %77 {approx = true} : vector<8x1xf32> -> vector<8x1xf32>
    %79 = vector.broadcast %78 : vector<8x1xf32> to vector<8x8xf32>
    %80 = arith.mulf %75, %79 : vector<8x8xf32>
    %cst_41 = arith.constant dense<0.000000e+00> : vector<8x8xf32>
    %81 = tpu.matmul %80, %52, %cst_41 {dimension_numbers = #tpu.dot_dimension_numbers<[1], [0], [0], [1], [0, 0, 1, 1], [], []>} : vector<8x8xf32>, vector<8x8xf32>, vector<8x8xf32> -> vector<8x8xf32>
    %c2 = arith.constant 2 : index
    %c0_42 = arith.constant 0 : index
    %82 = vector.load %arg4[%c2, %c0_42] : memref<24x32xf32, #tpu.memory_space<vmem>>, vector<1x8xf32>
    %c3 = arith.constant 3 : index
    %c0_43 = arith.constant 0 : index
    %83 = vector.load %arg4[%c3, %c0_43] : memref<24x32xf32, #tpu.memory_space<vmem>>, vector<1x8xf32>
    %84 = vector.broadcast %82 : vector<1x8xf32> to vector<8x8xf32>
    %85 = arith.mulf %81, %84 : vector<8x8xf32>
    %86 = vector.broadcast %83 : vector<1x8xf32> to vector<8x8xf32>
    %87 = arith.addf %85, %86 : vector<8x8xf32>
    %cst_44 = arith.constant 0.000000e+00 : f32
    %88 = vector.broadcast %cst_44 : f32 to vector<8x8xf32>
    %89 = arith.cmpf ogt, %87, %88 : vector<8x8xf32>
    %90 = math.exp %87 : vector<8x8xf32>
    %cst_45 = arith.constant 1.000000e+00 : f32
    %91 = vector.broadcast %cst_45 : f32 to vector<8x8xf32>
    %92 = arith.subf %90, %91 : vector<8x8xf32>
    %93 = arith.select %89, %87, %92 : vector<8x8xi1>, vector<8x8xf32>
    %c120 = arith.constant 120 : index
    %c0_46 = arith.constant 0 : index
    %94 = vector.load %arg3[%c120, %c0_46] : memref<400x32xf32, #tpu.memory_space<vmem>>, vector<16x8xf32>
    %cst_47 = arith.constant dense<0.000000e+00> : vector<8x8xf32>
    %95 = tpu.matmul %3, %94, %cst_47 {dimension_numbers = #tpu.dot_dimension_numbers<[1], [0], [0], [1], [0, 0, 1, 1], [], []>} : vector<8x16xf32>, vector<16x8xf32>, vector<8x8xf32> -> vector<8x8xf32>
    %cst_48 = arith.constant dense<0.000000e+00> : vector<8x8xf32>
    %96 = tpu.matmul %2, %95, %cst_48 {dimension_numbers = #tpu.dot_dimension_numbers<[1], [0], [0], [1], [0, 0, 1, 1], [], []>} : vector<8x8xf32>, vector<8x8xf32>, vector<8x8xf32> -> vector<8x8xf32>
    %c4 = arith.constant 4 : index
    %c0_49 = arith.constant 0 : index
    %97 = vector.load %arg4[%c4, %c0_49] : memref<24x32xf32, #tpu.memory_space<vmem>>, vector<1x8xf32>
    %c5 = arith.constant 5 : index
    %c0_50 = arith.constant 0 : index
    %98 = vector.load %arg4[%c5, %c0_50] : memref<24x32xf32, #tpu.memory_space<vmem>>, vector<1x8xf32>
    %99 = vector.broadcast %97 : vector<1x8xf32> to vector<8x8xf32>
    %100 = arith.mulf %96, %99 : vector<8x8xf32>
    %101 = vector.broadcast %98 : vector<1x8xf32> to vector<8x8xf32>
    %102 = arith.addf %100, %101 : vector<8x8xf32>
    %cst_51 = arith.constant 0.000000e+00 : f32
    %103 = vector.broadcast %cst_51 : f32 to vector<8x8xf32>
    %104 = arith.cmpf ogt, %102, %103 : vector<8x8xf32>
    %105 = math.exp %102 : vector<8x8xf32>
    %cst_52 = arith.constant 1.000000e+00 : f32
    %106 = vector.broadcast %cst_52 : f32 to vector<8x8xf32>
    %107 = arith.subf %105, %106 : vector<8x8xf32>
    %108 = arith.select %104, %102, %107 : vector<8x8xi1>, vector<8x8xf32>
    %c136 = arith.constant 136 : index
    %c0_53 = arith.constant 0 : index
    %109 = vector.load %arg3[%c136, %c0_53] : memref<400x32xf32, #tpu.memory_space<vmem>>, vector<8x8xf32>
    %cst_54 = arith.constant dense<0.000000e+00> : vector<8x8xf32>
    %110 = tpu.matmul %108, %109, %cst_54 {dimension_numbers = #tpu.dot_dimension_numbers<[1], [0], [0], [1], [0, 0, 1, 1], [], []>} : vector<8x8xf32>, vector<8x8xf32>, vector<8x8xf32> -> vector<8x8xf32>
    %cst_55 = arith.constant dense<0.000000e+00> : vector<8x8xf32>
    %111 = tpu.matmul %2, %110, %cst_55 {dimension_numbers = #tpu.dot_dimension_numbers<[1], [0], [0], [1], [0, 0, 1, 1], [], []>} : vector<8x8xf32>, vector<8x8xf32>, vector<8x8xf32> -> vector<8x8xf32>
    %c6 = arith.constant 6 : index
    %c0_56 = arith.constant 0 : index
    %112 = vector.load %arg4[%c6, %c0_56] : memref<24x32xf32, #tpu.memory_space<vmem>>, vector<1x8xf32>
    %c7 = arith.constant 7 : index
    %c0_57 = arith.constant 0 : index
    %113 = vector.load %arg4[%c7, %c0_57] : memref<24x32xf32, #tpu.memory_space<vmem>>, vector<1x8xf32>
    %114 = vector.broadcast %112 : vector<1x8xf32> to vector<8x8xf32>
    %115 = arith.mulf %111, %114 : vector<8x8xf32>
    %116 = vector.broadcast %113 : vector<1x8xf32> to vector<8x8xf32>
    %117 = arith.addf %115, %116 : vector<8x8xf32>
    %cst_58 = arith.constant 0.000000e+00 : f32
    %118 = vector.broadcast %cst_58 : f32 to vector<8x8xf32>
    %119 = arith.cmpf ogt, %117, %118 : vector<8x8xf32>
    %120 = math.exp %117 : vector<8x8xf32>
    %cst_59 = arith.constant 1.000000e+00 : f32
    %121 = vector.broadcast %cst_59 : f32 to vector<8x8xf32>
    %122 = arith.subf %120, %121 : vector<8x8xf32>
    %123 = arith.select %119, %117, %122 : vector<8x8xi1>, vector<8x8xf32>
    %c144 = arith.constant 144 : index
    %c0_60 = arith.constant 0 : index
    %124 = vector.load %arg3[%c144, %c0_60] : memref<400x32xf32, #tpu.memory_space<vmem>>, vector<8x8xf32>
    %cst_61 = arith.constant dense<0.000000e+00> : vector<8x8xf32>
    %125 = tpu.matmul %93, %124, %cst_61 {dimension_numbers = #tpu.dot_dimension_numbers<[1], [0], [0], [1], [0, 0, 1, 1], [], []>} : vector<8x8xf32>, vector<8x8xf32>, vector<8x8xf32> -> vector<8x8xf32>
    %c152 = arith.constant 152 : index
    %c0_62 = arith.constant 0 : index
    %126 = vector.load %arg3[%c152, %c0_62] : memref<400x32xf32, #tpu.memory_space<vmem>>, vector<8x8xf32>
    %cst_63 = arith.constant dense<0.000000e+00> : vector<8x8xf32>
    %127 = tpu.matmul %123, %126, %cst_63 {dimension_numbers = #tpu.dot_dimension_numbers<[1], [0], [0], [1], [0, 0, 1, 1], [], []>} : vector<8x8xf32>, vector<8x8xf32>, vector<8x8xf32> -> vector<8x8xf32>
    %128 = arith.addf %125, %127 : vector<8x8xf32>
    %c8 = arith.constant 8 : index
    %c0_64 = arith.constant 0 : index
    %129 = vector.load %arg4[%c8, %c0_64] : memref<24x32xf32, #tpu.memory_space<vmem>>, vector<1x8xf32>
    %c9 = arith.constant 9 : index
    %c0_65 = arith.constant 0 : index
    %130 = vector.load %arg4[%c9, %c0_65] : memref<24x32xf32, #tpu.memory_space<vmem>>, vector<1x8xf32>
    %131 = vector.broadcast %129 : vector<1x8xf32> to vector<8x8xf32>
    %132 = arith.mulf %128, %131 : vector<8x8xf32>
    %133 = vector.broadcast %130 : vector<1x8xf32> to vector<8x8xf32>
    %134 = arith.addf %132, %133 : vector<8x8xf32>
    %cst_66 = arith.constant 0.000000e+00 : f32
    %135 = vector.broadcast %cst_66 : f32 to vector<8x8xf32>
    %136 = arith.cmpf ogt, %134, %135 : vector<8x8xf32>
    %137 = math.exp %134 : vector<8x8xf32>
    %cst_67 = arith.constant 1.000000e+00 : f32
    %138 = vector.broadcast %cst_67 : f32 to vector<8x8xf32>
    %139 = arith.subf %137, %138 : vector<8x8xf32>
    %140 = arith.select %136, %134, %139 : vector<8x8xi1>, vector<8x8xf32>
    %c160 = arith.constant 160 : index
    %c0_68 = arith.constant 0 : index
    %141 = vector.load %arg3[%c160, %c0_68] : memref<400x32xf32, #tpu.memory_space<vmem>>, vector<8x32xf32>
    %cst_69 = arith.constant dense<0.000000e+00> : vector<8x32xf32>
    %142 = tpu.matmul %140, %141, %cst_69 {dimension_numbers = #tpu.dot_dimension_numbers<[1], [0], [0], [1], [0, 0, 1, 1], [], []>} : vector<8x8xf32>, vector<8x32xf32>, vector<8x32xf32> -> vector<8x32xf32>
    %c12 = arith.constant 12 : index
    %c0_70 = arith.constant 0 : index
    %143 = vector.load %arg4[%c12, %c0_70] : memref<24x32xf32, #tpu.memory_space<vmem>>, vector<1x32xf32>
    %144 = vector.broadcast %143 : vector<1x32xf32> to vector<8x32xf32>
    %145 = arith.addf %142, %144 : vector<8x32xf32>
    %c168 = arith.constant 168 : index
    %c0_71 = arith.constant 0 : index
    %146 = vector.load %arg3[%c168, %c0_71] : memref<400x32xf32, #tpu.memory_space<vmem>>, vector<8x32xf32>
    %cst_72 = arith.constant dense<0.000000e+00> : vector<8x32xf32>
    %147 = tpu.matmul %140, %146, %cst_72 {dimension_numbers = #tpu.dot_dimension_numbers<[1], [0], [0], [1], [0, 0, 1, 1], [], []>} : vector<8x8xf32>, vector<8x32xf32>, vector<8x32xf32> -> vector<8x32xf32>
    %c13 = arith.constant 13 : index
    %c0_73 = arith.constant 0 : index
    %148 = vector.load %arg4[%c13, %c0_73] : memref<24x32xf32, #tpu.memory_space<vmem>>, vector<1x32xf32>
    %149 = vector.broadcast %148 : vector<1x32xf32> to vector<8x32xf32>
    %150 = arith.addf %147, %149 : vector<8x32xf32>
    %c176 = arith.constant 176 : index
    %c0_74 = arith.constant 0 : index
    %151 = vector.load %arg3[%c176, %c0_74] : memref<400x32xf32, #tpu.memory_space<vmem>>, vector<8x32xf32>
    %cst_75 = arith.constant dense<0.000000e+00> : vector<8x32xf32>
    %152 = tpu.matmul %140, %151, %cst_75 {dimension_numbers = #tpu.dot_dimension_numbers<[1], [0], [0], [1], [0, 0, 1, 1], [], []>} : vector<8x8xf32>, vector<8x32xf32>, vector<8x32xf32> -> vector<8x32xf32>
    %c14 = arith.constant 14 : index
    %c0_76 = arith.constant 0 : index
    %153 = vector.load %arg4[%c14, %c0_76] : memref<24x32xf32, #tpu.memory_space<vmem>>, vector<1x32xf32>
    %154 = vector.broadcast %153 : vector<1x32xf32> to vector<8x32xf32>
    %155 = arith.addf %152, %154 : vector<8x32xf32>
    %156 = arith.mulf %145, %150 : vector<8x32xf32>
    %c336 = arith.constant 336 : index
    %c0_77 = arith.constant 0 : index
    %157 = vector.load %arg3[%c336, %c0_77] : memref<400x32xf32, #tpu.memory_space<vmem>>, vector<32x16xf32>
    %cst_78 = arith.constant dense<0.000000e+00> : vector<8x16xf32>
    %158 = tpu.matmul %156, %157, %cst_78 {dimension_numbers = #tpu.dot_dimension_numbers<[1], [0], [0], [1], [0, 0, 1, 1], [], []>} : vector<8x32xf32>, vector<32x16xf32>, vector<8x16xf32> -> vector<8x16xf32>
    %cst_79 = arith.constant dense<0xFF800000> : vector<8xf32>
    %159 = vector.multi_reduction <maximumf>, %158, %cst_79 [1] : vector<8x16xf32> to vector<8xf32>
    %160 = vector.shape_cast %159 : vector<8xf32> to vector<8x1xf32>
    %161 = vector.broadcast %160 : vector<8x1xf32> to vector<8x16xf32>
    %162 = arith.subf %158, %161 : vector<8x16xf32>
    %163 = math.exp %162 : vector<8x16xf32>
    %c368 = arith.constant 368 : index
    %c0_80 = arith.constant 0 : index
    %164 = vector.load %arg3[%c368, %c0_80] : memref<400x32xf32, #tpu.memory_space<vmem>>, vector<16x16xf32>
    %cst_81 = arith.constant dense<0.000000e+00> : vector<8x16xf32>
    %165 = tpu.matmul %163, %164, %cst_81 {dimension_numbers = #tpu.dot_dimension_numbers<[1], [0], [0], [1], [0, 0, 1, 1], [], []>} : vector<8x16xf32>, vector<16x16xf32>, vector<8x16xf32> -> vector<8x16xf32>
    %166 = tpu.reciprocal %165 {approx = true} : vector<8x16xf32> -> vector<8x16xf32>
    %167 = arith.mulf %163, %166 : vector<8x16xf32>
    %c384 = arith.constant 384 : index
    %c0_82 = arith.constant 0 : index
    %168 = vector.load %arg3[%c384, %c0_82] : memref<400x32xf32, #tpu.memory_space<vmem>>, vector<16x32xf32>
    %cst_83 = arith.constant dense<0.000000e+00> : vector<8x32xf32>
    %169 = tpu.matmul %167, %168, %cst_83 {dimension_numbers = #tpu.dot_dimension_numbers<[1], [0], [0], [1], [0, 0, 1, 1], [], []>} : vector<8x16xf32>, vector<16x32xf32>, vector<8x32xf32> -> vector<8x32xf32>
    %170 = arith.mulf %169, %155 : vector<8x32xf32>
    %c184 = arith.constant 184 : index
    %c0_84 = arith.constant 0 : index
    %171 = vector.load %arg3[%c184, %c0_84] : memref<400x32xf32, #tpu.memory_space<vmem>>, vector<32x8xf32>
    %cst_85 = arith.constant dense<0.000000e+00> : vector<8x8xf32>
    %172 = tpu.matmul %170, %171, %cst_85 {dimension_numbers = #tpu.dot_dimension_numbers<[1], [0], [0], [1], [0, 0, 1, 1], [], []>} : vector<8x32xf32>, vector<32x8xf32>, vector<8x8xf32> -> vector<8x8xf32>
    %c15 = arith.constant 15 : index
    %c0_86 = arith.constant 0 : index
    %173 = vector.load %arg4[%c15, %c0_86] : memref<24x32xf32, #tpu.memory_space<vmem>>, vector<1x8xf32>
    %174 = vector.broadcast %173 : vector<1x8xf32> to vector<8x8xf32>
    %175 = arith.addf %172, %174 : vector<8x8xf32>
    %c216 = arith.constant 216 : index
    %c0_87 = arith.constant 0 : index
    %176 = vector.load %arg3[%c216, %c0_87] : memref<400x32xf32, #tpu.memory_space<vmem>>, vector<8x8xf32>
    %cst_88 = arith.constant dense<0.000000e+00> : vector<8x8xf32>
    %177 = tpu.matmul %175, %176, %cst_88 {dimension_numbers = #tpu.dot_dimension_numbers<[1], [0], [0], [1], [0, 0, 1, 1], [], []>} : vector<8x8xf32>, vector<8x8xf32>, vector<8x8xf32> -> vector<8x8xf32>
    %c10 = arith.constant 10 : index
    %c0_89 = arith.constant 0 : index
    %178 = vector.load %arg4[%c10, %c0_89] : memref<24x32xf32, #tpu.memory_space<vmem>>, vector<1x8xf32>
    %c11 = arith.constant 11 : index
    %c0_90 = arith.constant 0 : index
    %179 = vector.load %arg4[%c11, %c0_90] : memref<24x32xf32, #tpu.memory_space<vmem>>, vector<1x8xf32>
    %180 = vector.broadcast %178 : vector<1x8xf32> to vector<8x8xf32>
    %181 = arith.mulf %177, %180 : vector<8x8xf32>
    %182 = vector.broadcast %179 : vector<1x8xf32> to vector<8x8xf32>
    %183 = arith.addf %181, %182 : vector<8x8xf32>
    %cst_91 = arith.constant 0.000000e+00 : f32
    %184 = vector.broadcast %cst_91 : f32 to vector<8x8xf32>
    %185 = arith.cmpf ogt, %183, %184 : vector<8x8xf32>
    %186 = math.exp %183 : vector<8x8xf32>
    %cst_92 = arith.constant 1.000000e+00 : f32
    %187 = vector.broadcast %cst_92 : f32 to vector<8x8xf32>
    %188 = arith.subf %186, %187 : vector<8x8xf32>
    %189 = arith.select %185, %183, %188 : vector<8x8xi1>, vector<8x8xf32>
    %c224 = arith.constant 224 : index
    %c0_93 = arith.constant 0 : index
    %190 = vector.load %arg3[%c224, %c0_93] : memref<400x32xf32, #tpu.memory_space<vmem>>, vector<8x8xf32>
    %cst_94 = arith.constant dense<0.000000e+00> : vector<8x8xf32>
    %191 = tpu.matmul %189, %190, %cst_94 {dimension_numbers = #tpu.dot_dimension_numbers<[1], [0], [0], [1], [0, 0, 1, 1], [], []>} : vector<8x8xf32>, vector<8x8xf32>, vector<8x8xf32> -> vector<8x8xf32>
    %c16_95 = arith.constant 16 : index
    %c0_96 = arith.constant 0 : index
    %192 = vector.load %arg4[%c16_95, %c0_96] : memref<24x32xf32, #tpu.memory_space<vmem>>, vector<1x8xf32>
    %193 = vector.broadcast %192 : vector<1x8xf32> to vector<8x8xf32>
    %194 = arith.addf %191, %193 : vector<8x8xf32>
    %cst_97 = arith.constant dense<0xFF800000> : vector<8xf32>
    %195 = vector.multi_reduction <maximumf>, %194, %cst_97 [1] : vector<8x8xf32> to vector<8xf32>
    %196 = vector.shape_cast %195 : vector<8xf32> to vector<8x1xf32>
    %197 = vector.broadcast %196 : vector<8x1xf32> to vector<8x8xf32>
    %198 = arith.subf %194, %197 : vector<8x8xf32>
    %199 = math.exp %198 : vector<8x8xf32>
    %cst_98 = arith.constant dense<0.000000e+00> : vector<8xf32>
    %200 = vector.multi_reduction <add>, %199, %cst_98 [1] : vector<8x8xf32> to vector<8xf32>
    %201 = vector.shape_cast %200 : vector<8xf32> to vector<8x1xf32>
    %202 = math.log %201 : vector<8x1xf32>
    %203 = vector.broadcast %202 : vector<8x1xf32> to vector<8x8xf32>
    %204 = arith.subf %198, %203 : vector<8x8xf32>
    %c0_99 = arith.constant 0 : index
    %c0_100 = arith.constant 0 : index
    %205 = vector.load %arg5[%c0_99, %c0_100] : memref<8x8xf32, #tpu.memory_space<vmem>>, vector<8x8xf32>
    tpu.vector_store %arg5[%c0_99, %c0_100], %204 {strides = array<i32>} : memref<8x8xf32, #tpu.memory_space<vmem>>, vector<8x8xf32>,
    return
  }
}

</mosaic_0001>

<llo_original>
// kernel: fwd.1
$region0: #{fwd.1}
  #allocation0 [shape = 'u32[]', space=smem, size = 0x4, offset = 0x4, fixed_abs, tag = 'smem constant byte address 0x4 - core index']
  #allocation1 [shape = 'u32[72,128]{1,0:T(1,128)}', space=vmem, size = 0x9000, scoped, tag = 'internal scratch']
  %s0 = inlined_call_operand.vmem [shape: f32[8,32], index: 0, kind: input, shape index: {}]
  %s1 = inlined_call_operand.vmem [shape: f32[8,8], index: 1, kind: input, shape index: {}]
  %s2 = inlined_call_operand.vmem [shape: f32[8,16], index: 2, kind: input, shape index: {}]
  %s3 = inlined_call_operand.vmem [shape: f32[400,32], index: 3, kind: input, shape index: {}]
  %s4 = inlined_call_operand.vmem [shape: f32[24,32], index: 4, kind: input, shape index: {}]
  %s5 = inlined_call_operand.hbm [shape: f32[8,8], index: 5, kind: output, shape index: {}]
  %s6 = sld [smem:[#allocation0]]
  $region30: #{fwd.1} parent=0
    _
  %s8 = ssub.s32 1, %s6
  %s9 = scalar_select 0, %s8, %s6
  $region1: #{fwd.1} parent=0
    #allocation2 [shape = 'u8[4096]{0}', space=vmem, size = 0x1000, scoped, tag = 'output window, operand 0, single buffered']
    #allocation3 [shape = 's32[1]{0}', space=sflag, size = 0x4, scoped, tag = 'scoped memory for fwd.1']
    %10 = vsyncpa [#allocation3], 0
    // Predicated region
    $region2: #{fwd.1} parent=1 // pred_check
      _
    $region3: #{fwd.1} parent=1 // pred_check_branch
      %12 = sbr.rel (0) target = $region5
    $region4: #{fwd.1} parent=1 // pred_region
      _
    $region5: #{fwd.1} parent=1 // pred_fallthru
      _
    // Predicated region
    $region6: #{fwd.1} parent=1 // pred_check
      _
    $region7: #{fwd.1} parent=1 // pred_check_branch
      %14 = sbr.rel (0) target = $region9
    $region8: #{fwd.1} parent=1 // pred_region
      _
    $region9: #{fwd.1} parent=1 // pred_fallthru
      _
    // Predicated region
    $region10: #{fwd.1} parent=1 // pred_check
      _
    $region11: #{fwd.1} parent=1 // pred_check_branch
      %16 = sbr.rel (0) target = $region13
    $region12: #{fwd.1} parent=1 // pred_region
      _
    $region13: #{fwd.1} parent=1 // pred_fallthru
      _
    // Predicated region
    $region14: #{fwd.1} parent=1 // pred_check
      _
    $region15: #{fwd.1} parent=1 // pred_check_branch
      %18 = sbr.rel (0) target = $region17
    $region16: #{fwd.1} parent=1 // pred_region
      _
    $region17: #{fwd.1} parent=1 // pred_fallthru
      _
    // Predicated region
    $region18: #{fwd.1} parent=1 // pred_check
      _
    $region19: #{fwd.1} parent=1 // pred_check_branch
      %20 = sbr.rel (0) target = $region21
    $region20: #{fwd.1} parent=1 // pred_region
      _
    $region21: #{fwd.1} parent=1 // pred_fallthru
      _
    %v21 = vld [vmem:[%s0] sm:$0xff]
    %v22 = vld [vmem:[%s1] sm:$0xff]
    %v23 = vld [vmem:[%s2] sm:$0xff]
    %v24 = vld [vmem:[%s3 + $0xe8] sm:$0xff]
    %v25 = vld [vmem:[%s3] sm:$0xff]
    %v26 = vld [vmem:[%s3 + $0x8] sm:$0xff]
    %vm27 = vcmask 130048
    %v29 = vsel %vm27, %v23, 0
    %31 = vmatpush.msra.mxu0 0.0
    %32 = vmatpush.msra.mxu0 0.0
    %33 = vmatpush.msra.mxu0 0.0
    %34 = vmatpush.msra.mxu0 0.0
    %35 = vmatpush.msra.mxu0 0.0
    %36 = vmatpush.msra.mxu0 0.0
    %37 = vmatpush.msra.mxu0 0.0
    %38 = vmatpush.msra.mxu0 0.0
    %39 = vmatpush.msra.mxu0 0.0
    %40 = vmatpush.msra.mxu0 0.0
    %41 = vmatpush.msra.mxu0 0.0
    %42 = vmatpush.msra.mxu0 0.0
    %43 = vmatpush.msra.mxu0 0.0
    %44 = vmatpush.msra.mxu0 0.0
    %45 = vmatpush.msra.mxu0 %v26
    %46 = vmatpush.msra.mxu0 %v25
    %47 = vmatmul.f32.gmra.mxu0 %v29
    %v48 = vpop.f32.mrf.mxu0
    %v49 = vadd.f32 0.0, %v48
    %50 = vdwg.mxu0
    %v51 = vld [vmem:[%s3 + $0x10] sm:$0xff]
    %v52 = vld [vmem:[%s3 + $0x18] sm:$0xff]
    %v53 = vld [vmem:[%s3 + $0x20] sm:$0xff]
    %v54 = vld [vmem:[%s3 + $0x28] sm:$0xff]
    %v55 = vld [vmem:[%s3 + $0x30] sm:$0xff]
    %v56 = vld [vmem:[%s3 + $0x38] sm:$0xff]
    %v57 = vld [vmem:[%s3 + $0x40] sm:$0xff]
    %v58 = vld [vmem:[%s3 + $0x48] sm:$0xff]
    %vm59 = vcmask 261120
    %v61 = vsel %vm59, %v49, 0
    %63 = vmatpush.msra.mxu0 0.0
    %64 = vmatpush.msra.mxu0 0.0
    %65 = vmatpush.msra.mxu0 0.0
    %66 = vmatpush.msra.mxu0 0.0
    %67 = vmatpush.msra.mxu0 0.0
    %68 = vmatpush.msra.mxu0 0.0
    %69 = vmatpush.msra.mxu0 0.0
    %70 = vmatpush.msra.mxu0 0.0
    %71 = vmatpush.msra.mxu0 0.0
    %72 = vmatpush.msra.mxu0 0.0
    %73 = vmatpush.msra.mxu0 0.0
    %74 = vmatpush.msra.mxu0 0.0
    %75 = vmatpush.msra.mxu0 %v58
    %76 = vmatpush.msra.mxu0 %v57
    %77 = vmatpush.msra.mxu0 %v56
    %78 = vmatpush.msra.mxu0 %v55
    %79 = vmatmul.f32.gmra.mxu0 %v61
    %v80 = vpop.f32.mrf.mxu0
    %v81 = vadd.f32 0.0, %v80
    %82 = vdwg.mxu0
    %v83 = vmul.f32 %v24, %v81
    %vm84 = vcmask 64512
    %v86 = vsel %vm84, 1.0, 0
    %88 = vmatpush.msra.mxu0 0.0
    %89 = vmatpush.msra.mxu0 0.0
    %90 = vmatpush.msra.mxu0 0.0
    %91 = vmatpush.msra.mxu0 0.0
    %92 = vmatpush.msra.mxu0 0.0
    %93 = vmatpush.msra.mxu0 0.0
    %94 = vmatpush.msra.mxu0 0.0
    %95 = vmatpush.msra.mxu0 0.0
    %96 = vmatpush.msra.mxu0 0.0
    %97 = vmatpush.msra.mxu0 0.0
    %98 = vmatpush.msra.mxu0 0.0
    %99 = vmatpush.msra.mxu0 0.0
    %100 = vmatpush.msra.mxu0 0.0
    %101 = vmatpush.msra.mxu0 0.0
    %102 = vmatpush.msra.mxu0 0.0
    %103 = vmatpush.msra.mxu0 %v83
    %104 = vmatmul.f32.gmra.mxu0 %v86
    %v105 = vpop.f32.mrf.mxu0
    %v106 = vadd.f32 0.0, %v105
    %107 = vdwg.mxu0
    %108 = vmatpush.msra.mxu0 0.0
    %109 = vmatpush.msra.mxu0 0.0
    %110 = vmatpush.msra.mxu0 0.0
    %111 = vmatpush.msra.mxu0 0.0
    %112 = vmatpush.msra.mxu0 0.0
    %113 = vmatpush.msra.mxu0 0.0
    %114 = vmatpush.msra.mxu0 0.0
    %115 = vmatpush.msra.mxu0 0.0
    %116 = vmatpush.msra.mxu0 0.0
    %117 = vmatpush.msra.mxu0 0.0
    %118 = vmatpush.msra.mxu0 0.0
    %119 = vmatpush.msra.mxu0 0.0
    %120 = vmatpush.msra.mxu0 %v54
    %121 = vmatpush.msra.mxu0 %v53
    %122 = vmatpush.msra.mxu0 %v52
    %123 = vmatpush.msra.mxu0 %v51
    %124 = vmatmul.f32.gmra.mxu0 %v61
    %v125 = vpop.f32.mrf.mxu0
    %v126 = vadd.f32 %v106, %v125
    %127 = vdwg.mxu0
    %vm128 = vcmp.gt.f32.partialorder %v126, 0.0
    %v129 = vmul.f32 %v126, 0.2
    %v130 = vsel %vm128, %v126, %v129
    %vm131 = vcmp.gt.f32.partialorder %v21, 0.0
    %v132 = vsel %vm131, %v130, -1e+30
    %v133 = vsel %vm59, %v132, -inf
    %134 = vmax.xlane.f32.xlu0 %v133
    %v135 = vpop.xlane.xlu0 %134
    %v136 = vsub.f32 %v132, %v135
    %v137 = vmul.f32 %v136, 1.442695
    %v138 = vpow.pop %v137
    %v139 = vld [vmem:[%s3 + $0x130] sm:$0xff]
    %v140 = vld [vmem:[%s3 + $0x138] sm:$0xff]
    %v141 = vld [vmem:[%s3 + $0x140] sm:$0xff]
    %v142 = vld [vmem:[%s3 + $0x148] sm:$0xff]
    %v144 = vsel %vm59, %v138, 0
    %146 = vmatpush.msra.mxu0 0.0
    %147 = vmatpush.msra.mxu0 0.0
    %148 = vmatpush.msra.mxu0 0.0
    %149 = vmatpush.msra.mxu0 0.0
    %150 = vmatpush.msra.mxu0 0.0
    %151 = vmatpush.msra.mxu0 0.0
    %152 = vmatpush.msra.mxu0 0.0
    %153 = vmatpush.msra.mxu0 0.0
    %154 = vmatpush.msra.mxu0 0.0
    %155 = vmatpush.msra.mxu0 0.0
    %156 = vmatpush.msra.mxu0 0.0
    %157 = vmatpush.msra.mxu0 0.0
    %158 = vmatpush.msra.mxu0 %v142
    %159 = vmatpush.msra.mxu0 %v141
    %160 = vmatpush.msra.mxu0 %v140
    %161 = vmatpush.msra.mxu0 %v139
    %162 = vmatmul.f32.gmra.mxu0 %v144
    %v163 = vpop.f32.mrf.mxu0
    %v164 = vadd.f32 0.0, %v163
    %165 = vdwg.mxu0
    %v166 = vrcp.pop %v164
    %v167 = vmul.f32 %v138, %v166
    %v168 = vld [vmem:[%s3 + $0xf0] sm:$0xff]
    %v169 = vld [vmem:[%s3 + $0xf8] sm:$0xff]
    %v170 = vld [vmem:[%s3 + $0x100] sm:$0xff]
    %v171 = vld [vmem:[%s3 + $0x108] sm:$0xff]
    %v173 = vsel %vm84, %v168, 0
    %v176 = vsel %vm84, %v169, 0
    %v179 = vsel %vm84, %v170, 0
    %v182 = vsel %vm84, %v171, 0
    %184 = vmatpush.msra.mxu0 0.0
    %185 = vmatpush.msra.mxu0 0.0
    %186 = vmatpush.msra.mxu0 0.0
    %187 = vmatpush.msra.mxu0 0.0
    %188 = vmatpush.msra.mxu0 0.0
    %189 = vmatpush.msra.mxu0 0.0
    %190 = vmatpush.msra.mxu0 0.0
    %191 = vmatpush.msra.mxu0 0.0
    %192 = vmatpush.msra.mxu0 0.0
    %193 = vmatpush.msra.mxu0 0.0
    %194 = vmatpush.msra.mxu0 0.0
    %195 = vmatpush.msra.mxu0 0.0
    %196 = vmatpush.msra.mxu0 0.0
    %197 = vmatpush.msra.mxu0 0.0
    %198 = vmatpush.msra.mxu0 0.0
    %199 = vmatpush.msra.mxu0 %v49
    %200 = vmatmul.f32.gmra.mxu0 %v173
    %v201 = vpop.f32.mrf.mxu0
    %v202 = vadd.f32 0.0, %v201
    %203 = vmatmul.f32.gmra.mxu0 %v176
    %v204 = vpop.f32.mrf.mxu0
    %v205 = vadd.f32 0.0, %v204
    %206 = vmatmul.f32.gmra.mxu0 %v179
    %v207 = vpop.f32.mrf.mxu0
    %v208 = vadd.f32 0.0, %v207
    %209 = vmatmul.f32.gmra.mxu0 %v182
    %v210 = vpop.f32.mrf.mxu0
    %v211 = vadd.f32 0.0, %v210
    %212 = vdwg.mxu0
    %v213 = vld [vmem:[%s3 + $0x110] sm:$0xff]
    %v214 = vld [vmem:[%s3 + $0x118] sm:$0xff]
    %v215 = vld [vmem:[%s3 + $0x120] sm:$0xff]
    %v216 = vld [vmem:[%s3 + $0x128] sm:$0xff]
    %v217 = vmul.f32 %v202, %v213
    %v218 = vmul.f32 %v205, %v214
    %v219 = vmul.f32 %v208, %v215
    %v220 = vmul.f32 %v211, %v216
    %v222 = vsel %vm59, %v167, 0
    %224 = vmatpush.msra.mxu0 0.0
    %225 = vmatpush.msra.mxu0 0.0
    %226 = vmatpush.msra.mxu0 0.0
    %227 = vmatpush.msra.mxu0 0.0
    %228 = vmatpush.msra.mxu0 0.0
    %229 = vmatpush.msra.mxu0 0.0
    %230 = vmatpush.msra.mxu0 0.0
    %231 = vmatpush.msra.mxu0 0.0
    %232 = vmatpush.msra.mxu0 0.0
    %233 = vmatpush.msra.mxu0 0.0
    %234 = vmatpush.msra.mxu0 0.0
    %235 = vmatpush.msra.mxu0 0.0
    %236 = vmatpush.msra.mxu0 %v220
    %237 = vmatpush.msra.mxu0 %v219
    %238 = vmatpush.msra.mxu0 %v218
    %239 = vmatpush.msra.mxu0 %v217
    %240 = vmatmul.f32.gmra.mxu0 %v222
    %v241 = vpop.f32.mrf.mxu0
    %v242 = vadd.f32 0.0, %v241
    %243 = vdwg.mxu0
    %v244 = vld [vmem:[%s4] sm:$0x1]
    %v245 = vld [vmem:[%s4 + $0x1] sm:$0x1]
    %v246 = vperm.slane %v244, 0
    %v247 = vmul.f32 %v242, %v246
    %v248 = vperm.slane %v245, 0
    %v249 = vadd.f32 %v247, %v248
    %vm250 = vcmp.gt.f32.partialorder %v249, 0.0
    %v251 = vmul.f32 %v249, 1.442695
    %v252 = vpow.pop %v251
    %v253 = vsub.f32 %v252, 1.0
    %v254 = vsel %vm250, %v249, %v253
    %v255 = vld [vmem:[%s3 + $0x50] sm:$0xff]
    %v256 = vld [vmem:[%s3 + $0x58] sm:$0xff]
    %v257 = vld [vmem:[%s3 + $0x60] sm:$0xff]
    %v258 = vld [vmem:[%s3 + $0x68] sm:$0xff]
    %v260 = vsel %vm59, %v254, 0
    %262 = vmatpush.msra.mxu0 0.0
    %263 = vmatpush.msra.mxu0 0.0
    %264 = vmatpush.msra.mxu0 0.0
    %265 = vmatpush.msra.mxu0 0.0
    %266 = vmatpush.msra.mxu0 0.0
    %267 = vmatpush.msra.mxu0 0.0
    %268 = vmatpush.msra.mxu0 0.0
    %269 = vmatpush.msra.mxu0 0.0
    %270 = vmatpush.msra.mxu0 0.0
    %271 = vmatpush.msra.mxu0 0.0
    %272 = vmatpush.msra.mxu0 0.0
    %273 = vmatpush.msra.mxu0 0.0
    %274 = vmatpush.msra.mxu0 %v258
    %275 = vmatpush.msra.mxu0 %v257
    %276 = vmatpush.msra.mxu0 %v256
    %277 = vmatpush.msra.mxu0 %v255
    %278 = vmatmul.f32.gmra.mxu0 %v260
    %v279 = vpop.f32.mrf.mxu0
    %v280 = vadd.f32 0.0, %v279
    %281 = vdwg.mxu0
    %v282 = vld [vmem:[%s3 + $0x70] sm:$0xff]
    %v284 = vsel %vm84, %v280, 0
    %286 = vmatpush.msra.mxu0 0.0
    %287 = vmatpush.msra.mxu0 0.0
    %288 = vmatpush.msra.mxu0 0.0
    %289 = vmatpush.msra.mxu0 0.0
    %290 = vmatpush.msra.mxu0 0.0
    %291 = vmatpush.msra.mxu0 0.0
    %292 = vmatpush.msra.mxu0 0.0
    %293 = vmatpush.msra.mxu0 0.0
    %294 = vmatpush.msra.mxu0 0.0
    %295 = vmatpush.msra.mxu0 0.0
    %296 = vmatpush.msra.mxu0 0.0
    %297 = vmatpush.msra.mxu0 0.0
    %298 = vmatpush.msra.mxu0 0.0
    %299 = vmatpush.msra.mxu0 0.0
    %300 = vmatpush.msra.mxu0 0.0
    %301 = vmatpush.msra.mxu0 %v282
    %302 = vmatmul.f32.gmra.mxu0 %v284
    %v303 = vpop.f32.mrf.mxu0
    %v304 = vadd.f32 0.0, %v303
    %305 = vdwg.mxu0
    %307 = vset.pattern.permute.xlu0 0
    %308 = vperm.xlu0 %307, %v304
    %v309 = vpop.permute.xlu0 %308
    %v311 = vmul.f32 %v24, %v309
    %312 = vmatpush.msra.mxu0 0.0
    %313 = vmatpush.msra.mxu0 0.0
    %314 = vmatpush.msra.mxu0 0.0
    %315 = vmatpush.msra.mxu0 0.0
    %316 = vmatpush.msra.mxu0 0.0
    %317 = vmatpush.msra.mxu0 0.0
    %318 = vmatpush.msra.mxu0 0.0
    %319 = vmatpush.msra.mxu0 0.0
    %320 = vmatpush.msra.mxu0 0.0
    %321 = vmatpush.msra.mxu0 0.0
    %322 = vmatpush.msra.mxu0 0.0
    %323 = vmatpush.msra.mxu0 0.0
    %324 = vmatpush.msra.mxu0 0.0
    %325 = vmatpush.msra.mxu0 0.0
    %326 = vmatpush.msra.mxu0 0.0
    %327 = vmatpush.msra.mxu0 %v311
    %328 = vmatmul.f32.gmra.mxu0 %v86
    %v329 = vpop.f32.mrf.mxu0
    %v330 = vadd.f32 0.0, %v329
    %331 = vdwg.mxu0
    %332 = vset.pattern.permute.xlu0 1
    %333 = vperm.xlu0 %332, %v304
    %v334 = vpop.permute.xlu0 %333
    %v336 = vadd.f32 %v334, %v330
    %vm337 = vcmp.gt.f32.partialorder %v336, 0.0
    %v338 = vmul.f32 %v336, 0.2
    %v339 = vsel %vm337, %v336, %v338
    %v340 = vsel %vm131, %v339, -1e+30
    %v341 = vsel %vm84, %v340, -inf
    %342 = vmax.xlane.f32.xlu0 %v341
    %v343 = vpop.xlane.xlu0 %342
    %v344 = vsub.f32 %v340, %v343
    %v345 = vmul.f32 %v344, 1.442695
    %v346 = vpow.pop %v345
    %v347 = vsel %vm84, %v346, 0.0
    %348 = vadd.xlane.f32.xlu0 %v347
    %v349 = vpop.xlane.xlu0 %348
    %v350 = vrcp.pop %v349
    %v351 = vmul.f32 %v346, %v350
    %v353 = vsel %vm84, %v351, 0
    %355 = vmatpush.msra.mxu0 0.0
    %356 = vmatpush.msra.mxu0 0.0
    %357 = vmatpush.msra.mxu0 0.0
    %358 = vmatpush.msra.mxu0 0.0
    %359 = vmatpush.msra.mxu0 0.0
    %360 = vmatpush.msra.mxu0 0.0
    %361 = vmatpush.msra.mxu0 0.0
    %362 = vmatpush.msra.mxu0 0.0
    %363 = vmatpush.msra.mxu0 0.0
    %364 = vmatpush.msra.mxu0 0.0
    %365 = vmatpush.msra.mxu0 0.0
    %366 = vmatpush.msra.mxu0 0.0
    %367 = vmatpush.msra.mxu0 0.0
    %368 = vmatpush.msra.mxu0 0.0
    %369 = vmatpush.msra.mxu0 0.0
    %370 = vmatpush.msra.mxu0 %v280
    %371 = vmatmul.f32.gmra.mxu0 %v353
    %v372 = vpop.f32.mrf.mxu0
    %v373 = vadd.f32 0.0, %v372
    %374 = vdwg.mxu0
    %v375 = vld [vmem:[%s4 + $0x2] sm:$0x1]
    %v376 = vld [vmem:[%s4 + $0x3] sm:$0x1]
    %v377 = vperm.slane %v375, 0
    %v378 = vmul.f32 %v373, %v377
    %v379 = vperm.slane %v376, 0
    %v380 = vadd.f32 %v378, %v379
    %vm381 = vcmp.gt.f32.partialorder %v380, 0.0
    %v382 = vmul.f32 %v380, 1.442695
    %v383 = vpow.pop %v382
    %v384 = vsub.f32 %v383, 1.0
    %v385 = vsel %vm381, %v380, %v384
    %v386 = vld [vmem:[%s3 + $0x78] sm:$0xff]
    %v387 = vld [vmem:[%s3 + $0x80] sm:$0xff]
    %388 = vmatpush.msra.mxu0 0.0
    %389 = vmatpush.msra.mxu0 0.0
    %390 = vmatpush.msra.mxu0 0.0
    %391 = vmatpush.msra.mxu0 0.0
    %392 = vmatpush.msra.mxu0 0.0
    %393 = vmatpush.msra.mxu0 0.0
    %394 = vmatpush.msra.mxu0 0.0
    %395 = vmatpush.msra.mxu0 0.0
    %396 = vmatpush.msra.mxu0 0.0
    %397 = vmatpush.msra.mxu0 0.0
    %398 = vmatpush.msra.mxu0 0.0
    %399 = vmatpush.msra.mxu0 0.0
    %400 = vmatpush.msra.mxu0 0.0
    %401 = vmatpush.msra.mxu0 0.0
    %402 = vmatpush.msra.mxu0 %v387
    %403 = vmatpush.msra.mxu0 %v386
    %404 = vmatmul.f32.gmra.mxu0 %v29
    %v405 = vpop.f32.mrf.mxu0
    %v406 = vadd.f32 0.0, %v405
    %407 = vdwg.mxu0
    %v409 = vsel %vm84, %v22, 0
    %411 = vmatpush.msra.mxu0 0.0
    %412 = vmatpush.msra.mxu0 0.0
    %413 = vmatpush.msra.mxu0 0.0
    %414 = vmatpush.msra.mxu0 0.0
    %415 = vmatpush.msra.mxu0 0.0
    %416 = vmatpush.msra.mxu0 0.0
    %417 = vmatpush.msra.mxu0 0.0
    %418 = vmatpush.msra.mxu0 0.0
    %419 = vmatpush.msra.mxu0 0.0
    %420 = vmatpush.msra.mxu0 0.0
    %421 = vmatpush.msra.mxu0 0.0
    %422 = vmatpush.msra.mxu0 0.0
    %423 = vmatpush.msra.mxu0 0.0
    %424 = vmatpush.msra.mxu0 0.0
    %425 = vmatpush.msra.mxu0 0.0
    %426 = vmatpush.msra.mxu0 %v406
    %427 = vmatmul.f32.gmra.mxu0 %v409
    %v428 = vpop.f32.mrf.mxu0
    %v429 = vadd.f32 0.0, %v428
    %430 = vdwg.mxu0
    %v431 = vld [vmem:[%s4 + $0x4] sm:$0x1]
    %v432 = vld [vmem:[%s4 + $0x5] sm:$0x1]
    %v433 = vperm.slane %v431, 0
    %v434 = vmul.f32 %v429, %v433
    %v435 = vperm.slane %v432, 0
    %v436 = vadd.f32 %v434, %v435
    %vm437 = vcmp.gt.f32.partialorder %v436, 0.0
    %v438 = vmul.f32 %v436, 1.442695
    %v439 = vpow.pop %v438
    %v440 = vsub.f32 %v439, 1.0
    %v441 = vsel %vm437, %v436, %v440
    %v442 = vld [vmem:[%s3 + $0x88] sm:$0xff]
    %v444 = vsel %vm84, %v441, 0
    %446 = vmatpush.msra.mxu0 0.0
    %447 = vmatpush.msra.mxu0 0.0
    %448 = vmatpush.msra.mxu0 0.0
    %449 = vmatpush.msra.mxu0 0.0
    %450 = vmatpush.msra.mxu0 0.0
    %451 = vmatpush.msra.mxu0 0.0
    %452 = vmatpush.msra.mxu0 0.0
    %453 = vmatpush.msra.mxu0 0.0
    %454 = vmatpush.msra.mxu0 0.0
    %455 = vmatpush.msra.mxu0 0.0
    %456 = vmatpush.msra.mxu0 0.0
    %457 = vmatpush.msra.mxu0 0.0
    %458 = vmatpush.msra.mxu0 0.0
    %459 = vmatpush.msra.mxu0 0.0
    %460 = vmatpush.msra.mxu0 0.0
    %461 = vmatpush.msra.mxu0 %v442
    %462 = vmatmul.f32.gmra.mxu0 %v444
    %v463 = vpop.f32.mrf.mxu0
    %v464 = vadd.f32 0.0, %v463
    %465 = vdwg.mxu0
    %466 = vmatpush.msra.mxu0 0.0
    %467 = vmatpush.msra.mxu0 0.0
    %468 = vmatpush.msra.mxu0 0.0
    %469 = vmatpush.msra.mxu0 0.0
    %470 = vmatpush.msra.mxu0 0.0
    %471 = vmatpush.msra.mxu0 0.0
    %472 = vmatpush.msra.mxu0 0.0
    %473 = vmatpush.msra.mxu0 0.0
    %474 = vmatpush.msra.mxu0 0.0
    %475 = vmatpush.msra.mxu0 0.0
    %476 = vmatpush.msra.mxu0 0.0
    %477 = vmatpush.msra.mxu0 0.0
    %478 = vmatpush.msra.mxu0 0.0
    %479 = vmatpush.msra.mxu0 0.0
    %480 = vmatpush.msra.mxu0 0.0
    %481 = vmatpush.msra.mxu0 %v464
    %482 = vmatmul.f32.gmra.mxu0 %v409
    %v483 = vpop.f32.mrf.mxu0
    %v484 = vadd.f32 0.0, %v483
    %485 = vdwg.mxu0
    %v486 = vld [vmem:[%s4 + $0x6] sm:$0x1]
    %v487 = vld [vmem:[%s4 + $0x7] sm:$0x1]
    %v488 = vperm.slane %v486, 0
    %v489 = vmul.f32 %v484, %v488
    %v490 = vperm.slane %v487, 0
    %v491 = vadd.f32 %v489, %v490
    %vm492 = vcmp.gt.f32.partialorder %v491, 0.0
    %v493 = vmul.f32 %v491, 1.442695
    %v494 = vpow.pop %v493
    %v495 = vsub.f32 %v494, 1.0
    %v496 = vsel %vm492, %v491, %v495
    %v497 = vld [vmem:[%s3 + $0x90] sm:$0xff]
    %v498 = vld [vmem:[%s3 + $0x98] sm:$0xff]
    %v500 = vsel %vm84, %v496, 0
    %502 = vmatpush.msra.mxu0 0.0
    %503 = vmatpush.msra.mxu0 0.0
    %504 = vmatpush.msra.mxu0 0.0
    %505 = vmatpush.msra.mxu0 0.0
    %506 = vmatpush.msra.mxu0 0.0
    %507 = vmatpush.msra.mxu0 0.0
    %508 = vmatpush.msra.mxu0 0.0
    %509 = vmatpush.msra.mxu0 0.0
    %510 = vmatpush.msra.mxu0 0.0
    %511 = vmatpush.msra.mxu0 0.0
    %512 = vmatpush.msra.mxu0 0.0
    %513 = vmatpush.msra.mxu0 0.0
    %514 = vmatpush.msra.mxu0 0.0
    %515 = vmatpush.msra.mxu0 0.0
    %516 = vmatpush.msra.mxu0 0.0
    %517 = vmatpush.msra.mxu0 %v498
    %518 = vmatmul.f32.gmra.mxu0 %v500
    %v519 = vpop.f32.mrf.mxu0
    %v520 = vadd.f32 0.0, %v519
    %521 = vdwg.mxu0
    %v523 = vsel %vm84, %v385, 0
    %525 = vmatpush.msra.mxu0 0.0
    %526 = vmatpush.msra.mxu0 0.0
    %527 = vmatpush.msra.mxu0 0.0
    %528 = vmatpush.msra.mxu0 0.0
    %529 = vmatpush.msra.mxu0 0.0
    %530 = vmatpush.msra.mxu0 0.0
    %531 = vmatpush.msra.mxu0 0.0
    %532 = vmatpush.msra.mxu0 0.0
    %533 = vmatpush.msra.mxu0 0.0
    %534 = vmatpush.msra.mxu0 0.0
    %535 = vmatpush.msra.mxu0 0.0
    %536 = vmatpush.msra.mxu0 0.0
    %537 = vmatpush.msra.mxu0 0.0
    %538 = vmatpush.msra.mxu0 0.0
    %539 = vmatpush.msra.mxu0 0.0
    %540 = vmatpush.msra.mxu0 %v497
    %541 = vmatmul.f32.gmra.mxu0 %v523
    %v542 = vpop.f32.mrf.mxu0
    %v543 = vadd.f32 %v520, %v542
    %544 = vdwg.mxu0
    %v545 = vld [vmem:[%s4 + $0x8] sm:$0x1]
    %v546 = vld [vmem:[%s4 + $0x9] sm:$0x1]
    %v547 = vperm.slane %v545, 0
    %v548 = vmul.f32 %v543, %v547
    %v549 = vperm.slane %v546, 0
    %v550 = vadd.f32 %v548, %v549
    %vm551 = vcmp.gt.f32.partialorder %v550, 0.0
    %v552 = vmul.f32 %v550, 1.442695
    %v553 = vpow.pop %v552
    %v554 = vsub.f32 %v553, 1.0
    %v555 = vsel %vm551, %v550, %v554
    %v556 = vld [vmem:[%s3 + $0xa0] sm:$0xff]
    %v557 = vld [vmem:[%s4 + $0xc] sm:$0x1]
    %v558 = vperm.slane %v557, 0
    %v560 = vsel %vm84, %v555, 0
    %562 = vmatpush.msra.mxu0 0.0
    %563 = vmatpush.msra.mxu0 0.0
    %564 = vmatpush.msra.mxu0 0.0
    %565 = vmatpush.msra.mxu0 0.0
    %566 = vmatpush.msra.mxu0 0.0
    %567 = vmatpush.msra.mxu0 0.0
    %568 = vmatpush.msra.mxu0 0.0
    %569 = vmatpush.msra.mxu0 0.0
    %570 = vmatpush.msra.mxu0 0.0
    %571 = vmatpush.msra.mxu0 0.0
    %572 = vmatpush.msra.mxu0 0.0
    %573 = vmatpush.msra.mxu0 0.0
    %574 = vmatpush.msra.mxu0 0.0
    %575 = vmatpush.msra.mxu0 0.0
    %576 = vmatpush.msra.mxu0 0.0
    %577 = vmatpush.msra.mxu0 %v556
    %578 = vmatmul.f32.gmra.mxu0 %v560
    %v579 = vpop.f32.mrf.mxu0
    %v580 = vadd.f32 %v558, %v579
    %581 = vdwg.mxu0
    %v582 = vld [vmem:[%s3 + $0xa8] sm:$0xff]
    %v583 = vld [vmem:[%s4 + $0xd] sm:$0x1]
    %v584 = vperm.slane %v583, 0
    %585 = vmatpush.msra.mxu0 0.0
    %586 = vmatpush.msra.mxu0 0.0
    %587 = vmatpush.msra.mxu0 0.0
    %588 = vmatpush.msra.mxu0 0.0
    %589 = vmatpush.msra.mxu0 0.0
    %590 = vmatpush.msra.mxu0 0.0
    %591 = vmatpush.msra.mxu0 0.0
    %592 = vmatpush.msra.mxu0 0.0
    %593 = vmatpush.msra.mxu0 0.0
    %594 = vmatpush.msra.mxu0 0.0
    %595 = vmatpush.msra.mxu0 0.0
    %596 = vmatpush.msra.mxu0 0.0
    %597 = vmatpush.msra.mxu0 0.0
    %598 = vmatpush.msra.mxu0 0.0
    %599 = vmatpush.msra.mxu0 0.0
    %600 = vmatpush.msra.mxu0 %v582
    %601 = vmatmul.f32.gmra.mxu0 %v560
    %v602 = vpop.f32.mrf.mxu0
    %v603 = vadd.f32 %v584, %v602
    %604 = vdwg.mxu0
    %v605 = vld [vmem:[%s3 + $0xb0] sm:$0xff]
    %v606 = vld [vmem:[%s4 + $0xe] sm:$0x1]
    %v607 = vperm.slane %v606, 0
    %608 = vmatpush.msra.mxu0 0.0
    %609 = vmatpush.msra.mxu0 0.0
    %610 = vmatpush.msra.mxu0 0.0
    %611 = vmatpush.msra.mxu0 0.0
    %612 = vmatpush.msra.mxu0 0.0
    %613 = vmatpush.msra.mxu0 0.0
    %614 = vmatpush.msra.mxu0 0.0
    %615 = vmatpush.msra.mxu0 0.0
    %616 = vmatpush.msra.mxu0 0.0
    %617 = vmatpush.msra.mxu0 0.0
    %618 = vmatpush.msra.mxu0 0.0
    %619 = vmatpush.msra.mxu0 0.0
    %620 = vmatpush.msra.mxu0 0.0
    %621 = vmatpush.msra.mxu0 0.0
    %622 = vmatpush.msra.mxu0 0.0
    %623 = vmatpush.msra.mxu0 %v605
    %624 = vmatmul.f32.gmra.mxu0 %v560
    %v625 = vpop.f32.mrf.mxu0
    %v626 = vadd.f32 %v607, %v625
    %627 = vdwg.mxu0
    %v628 = vmul.f32 %v580, %v603
    %v629 = vld [vmem:[%s3 + $0x150] sm:$0xff]
    %v630 = vld [vmem:[%s3 + $0x158] sm:$0xff]
    %v631 = vld [vmem:[%s3 + $0x160] sm:$0xff]
    %v632 = vld [vmem:[%s3 + $0x168] sm:$0xff]
    %v634 = vsel %vm59, %v628, 0
    %636 = vmatpush.msra.mxu0 0.0
    %637 = vmatpush.msra.mxu0 0.0
    %638 = vmatpush.msra.mxu0 0.0
    %639 = vmatpush.msra.mxu0 0.0
    %640 = vmatpush.msra.mxu0 0.0
    %641 = vmatpush.msra.mxu0 0.0
    %642 = vmatpush.msra.mxu0 0.0
    %643 = vmatpush.msra.mxu0 0.0
    %644 = vmatpush.msra.mxu0 0.0
    %645 = vmatpush.msra.mxu0 0.0
    %646 = vmatpush.msra.mxu0 0.0
    %647 = vmatpush.msra.mxu0 0.0
    %648 = vmatpush.msra.mxu0 %v632
    %649 = vmatpush.msra.mxu0 %v631
    %650 = vmatpush.msra.mxu0 %v630
    %651 = vmatpush.msra.mxu0 %v629
    %652 = vmatmul.f32.gmra.mxu0 %v634
    %v653 = vpop.f32.mrf.mxu0
    %v654 = vadd.f32 0.0, %v653
    %655 = vdwg.mxu0
    %v656 = vsel %vm27, %v654, -inf
    %657 = vmax.xlane.f32.xlu0 %v656
    %v658 = vpop.xlane.xlu0 %657
    %v659 = vsub.f32 %v654, %v658
    %v660 = vmul.f32 %v659, 1.442695
    %v661 = vpow.pop %v660
    %v662 = vld [vmem:[%s3 + $0x170] sm:$0xff]
    %v663 = vld [vmem:[%s3 + $0x178] sm:$0xff]
    %v665 = vsel %vm27, %v661, 0
    %667 = vmatpush.msra.mxu0 0.0
    %668 = vmatpush.msra.mxu0 0.0
    %669 = vmatpush.msra.mxu0 0.0
    %670 = vmatpush.msra.mxu0 0.0
    %671 = vmatpush.msra.mxu0 0.0
    %672 = vmatpush.msra.mxu0 0.0
    %673 = vmatpush.msra.mxu0 0.0
    %674 = vmatpush.msra.mxu0 0.0
    %675 = vmatpush.msra.mxu0 0.0
    %676 = vmatpush.msra.mxu0 0.0
    %677 = vmatpush.msra.mxu0 0.0
    %678 = vmatpush.msra.mxu0 0.0
    %679 = vmatpush.msra.mxu0 0.0
    %680 = vmatpush.msra.mxu0 0.0
    %681 = vmatpush.msra.mxu0 %v663
    %682 = vmatpush.msra.mxu0 %v662
    %683 = vmatmul.f32.gmra.mxu0 %v665
    %v684 = vpop.f32.mrf.mxu0
    %v685 = vadd.f32 0.0, %v684
    %686 = vdwg.mxu0
    %v687 = vrcp.pop %v685
    %v688 = vmul.f32 %v661, %v687
    %v689 = vld [vmem:[%s3 + $0x180] sm:$0xff]
    %v690 = vld [vmem:[%s3 + $0x188] sm:$0xff]
    %v692 = vsel %vm27, %v688, 0
    %694 = vmatpush.msra.mxu0 0.0
    %695 = vmatpush.msra.mxu0 0.0
    %696 = vmatpush.msra.mxu0 0.0
    %697 = vmatpush.msra.mxu0 0.0
    %698 = vmatpush.msra.mxu0 0.0
    %699 = vmatpush.msra.mxu0 0.0
    %700 = vmatpush.msra.mxu0 0.0
    %701 = vmatpush.msra.mxu0 0.0
    %702 = vmatpush.msra.mxu0 0.0
    %703 = vmatpush.msra.mxu0 0.0
    %704 = vmatpush.msra.mxu0 0.0
    %705 = vmatpush.msra.mxu0 0.0
    %706 = vmatpush.msra.mxu0 0.0
    %707 = vmatpush.msra.mxu0 0.0
    %708 = vmatpush.msra.mxu0 %v690
    %709 = vmatpush.msra.mxu0 %v689
    %710 = vmatmul.f32.gmra.mxu0 %v692
    %v711 = vpop.f32.mrf.mxu0
    %v712 = vadd.f32 0.0, %v711
    %713 = vdwg.mxu0
    %v714 = vmul.f32 %v712, %v626
    %v715 = vld [vmem:[%s3 + $0xb8] sm:$0xff]
    %v716 = vld [vmem:[%s3 + $0xc0] sm:$0xff]
    %v717 = vld [vmem:[%s3 + $0xc8] sm:$0xff]
    %v718 = vld [vmem:[%s3 + $0xd0] sm:$0xff]
    %v719 = vld [vmem:[%s4 + $0xf] sm:$0x1]
    %v720 = vperm.slane %v719, 0
    %v722 = vsel %vm59, %v714, 0
    %724 = vmatpush.msra.mxu0 0.0
    %725 = vmatpush.msra.mxu0 0.0
    %726 = vmatpush.msra.mxu0 0.0
    %727 = vmatpush.msra.mxu0 0.0
    %728 = vmatpush.msra.mxu0 0.0
    %729 = vmatpush.msra.mxu0 0.0
    %730 = vmatpush.msra.mxu0 0.0
    %731 = vmatpush.msra.mxu0 0.0
    %732 = vmatpush.msra.mxu0 0.0
    %733 = vmatpush.msra.mxu0 0.0
    %734 = vmatpush.msra.mxu0 0.0
    %735 = vmatpush.msra.mxu0 0.0
    %736 = vmatpush.msra.mxu0 %v718
    %737 = vmatpush.msra.mxu0 %v717
    %738 = vmatpush.msra.mxu0 %v716
    %739 = vmatpush.msra.mxu0 %v715
    %740 = vmatmul.f32.gmra.mxu0 %v722
    %v741 = vpop.f32.mrf.mxu0
    %v742 = vadd.f32 %v720, %v741
    %743 = vdwg.mxu0
    %v744 = vld [vmem:[%s3 + $0xd8] sm:$0xff]
    %v746 = vsel %vm84, %v742, 0
    %748 = vmatpush.msra.mxu0 0.0
    %749 = vmatpush.msra.mxu0 0.0
    %750 = vmatpush.msra.mxu0 0.0
    %751 = vmatpush.msra.mxu0 0.0
    %752 = vmatpush.msra.mxu0 0.0
    %753 = vmatpush.msra.mxu0 0.0
    %754 = vmatpush.msra.mxu0 0.0
    %755 = vmatpush.msra.mxu0 0.0
    %756 = vmatpush.msra.mxu0 0.0
    %757 = vmatpush.msra.mxu0 0.0
    %758 = vmatpush.msra.mxu0 0.0
    %759 = vmatpush.msra.mxu0 0.0
    %760 = vmatpush.msra.mxu0 0.0
    %761 = vmatpush.msra.mxu0 0.0
    %762 = vmatpush.msra.mxu0 0.0
    %763 = vmatpush.msra.mxu0 %v744
    %764 = vmatmul.f32.gmra.mxu0 %v746
    %v765 = vpop.f32.mrf.mxu0
    %v766 = vadd.f32 0.0, %v765
    %767 = vdwg.mxu0
    %v768 = vld [vmem:[%s4 + $0xa] sm:$0x1]
    %v769 = vld [vmem:[%s4 + $0xb] sm:$0x1]
    %v770 = vperm.slane %v768, 0
    %v771 = vmul.f32 %v766, %v770
    %v772 = vperm.slane %v769, 0
    %v773 = vadd.f32 %v771, %v772
    %vm774 = vcmp.gt.f32.partialorder %v773, 0.0
    %v775 = vmul.f32 %v773, 1.442695
    %v776 = vpow.pop %v775
    %v777 = vsub.f32 %v776, 1.0
    %v778 = vsel %vm774, %v773, %v777
    %v779 = vld [vmem:[%s3 + $0xe0] sm:$0xff]
    %v780 = vld [vmem:[%s4 + $0x10] sm:$0x1]
    %v781 = vperm.slane %v780, 0
    %v783 = vsel %vm84, %v778, 0
    %785 = vmatpush.msra.mxu0 0.0
    %786 = vmatpush.msra.mxu0 0.0
    %787 = vmatpush.msra.mxu0 0.0
    %788 = vmatpush.msra.mxu0 0.0
    %789 = vmatpush.msra.mxu0 0.0
    %790 = vmatpush.msra.mxu0 0.0
    %791 = vmatpush.msra.mxu0 0.0
    %792 = vmatpush.msra.mxu0 0.0
    %793 = vmatpush.msra.mxu0 0.0
    %794 = vmatpush.msra.mxu0 0.0
    %795 = vmatpush.msra.mxu0 0.0
    %796 = vmatpush.msra.mxu0 0.0
    %797 = vmatpush.msra.mxu0 0.0
    %798 = vmatpush.msra.mxu0 0.0
    %799 = vmatpush.msra.mxu0 0.0
    %800 = vmatpush.msra.mxu0 %v779
    %801 = vmatmul.f32.gmra.mxu0 %v783
    %v802 = vpop.f32.mrf.mxu0
    %v803 = vadd.f32 %v781, %v802
    %804 = vdwg.mxu0
    %v805 = vsel %vm84, %v803, -inf
    %806 = vmax.xlane.f32.xlu0 %v805
    %v807 = vpop.xlane.xlu0 %806
    %v808 = vsub.f32 %v803, %v807
    %v809 = vmul.f32 %v808, 1.442695
    %v810 = vpow.pop %v809
    %v811 = vsel %vm84, %v810, 0.0
    %812 = vadd.xlane.f32.xlu0 %v811
    %v813 = vpop.xlane.xlu0 %812
    %v814 = vlog2.pop %v813
    %v815 = vmul.f32 %v814, 0.6931472
    %v816 = vsub.f32 %v808, %v815
    %817 = vst.msk [vmem:[#allocation2] sm:$0xff] %vm84, %v816
    // Predicated region
    $region22: #{fwd.1} parent=1 // pred_check
      _
    $region23: #{fwd.1} parent=1 // pred_check_branch
      %819 = sbr.rel (0) target = $region25
    $region24: #{fwd.1} parent=1 // pred_region
      %821 = vsyncadd [#allocation3], 0
      %s823 = sshll.u32 [#allocation2], 4
      %s824 = int_to_ptr.vmem [resolvable:$true] %s823
      %s825 = sshll.u32 %s5, 4
      %s826 = int_to_ptr.hbm [resolvable:$true] %s825
      %828 = dma.vmem_to_hbm [thread:$0]  %s824, 128, %s826, [#allocation3]
    $region25: #{fwd.1} parent=1 // pred_fallthru
      _
    // Predicated region
    $region26: #{fwd.1} parent=1 // pred_check
      _
    $region27: #{fwd.1} parent=1 // pred_check_branch
      %830 = sbr.rel (0) target = $region29
    $region28: #{fwd.1} parent=1 // pred_region
      %832 = dma.done [#allocation3], 128
    $region29: #{fwd.1} parent=1 // pred_fallthru
      _
    %833 = vsyncpa [#allocation3], 1

</llo_original>
